<compile_context>
chip_gen: v5e
topology: v5e:2x2
jax: 0.10.0
libtpu: 0.0.40
codegen_flags: <defaults>
</compile_context>

<pallas_src>
import functools

import jax
import jax.numpy as jnp
from jax import lax
from jax.experimental import pallas as pl
from jax.experimental.pallas import tpu as pltpu


def _dsconv_kernel(x_ref, pos_ref, wdw_ref, wf_ref, bf_ref, o_ref,
                   *, H, W, KH, KW, pad):
    """Whole (batch-folded) problem in a single grid step.

    x_ref  : (N*C, S)        one (image, channel) per sublane row, S = H*W on lanes
    pos_ref: (2, S) int32    row 0 = per-pixel h, row 1 = per-pixel w (precomputed)
    wdw_ref: (N*C, KH*KW)    depthwise weights (replicated per image), one column per tap
    wf_ref : (N*Cout, N*C)   block-diagonal fused (bottleneck @ pointwise) weights
    bf_ref : (N*Cout, 1)     fully fused bias (depthwise + bottleneck + pointwise)
    o_ref  : (N*Cout, S)
    """
    S = x_ref.shape[1]
    x = x_ref[...]                       # (N*C, S)
    wdw = wdw_ref[...]                   # (N*C, KH*KW), loaded once

    # Per-pixel coordinates, (1, S) rows; masks vary only along lanes.
    pos = pos_ref[...]
    hp = pos[0:1, :]
    wp = pos[1:2, :]

    # (1, S) boundary masks, built once; jnp.where broadcasts them along sublanes.
    valid_h = [(hp + d >= 0) & (hp + d < H) for d in range(-pad, KH - pad)]
    valid_w = [(wp + d >= 0) & (wp + d < W) for d in range(-pad, KW - pad)]

    # ---- depthwise KHxKW conv: each tap = lane roll (XLU) + masked MAC (VPU)
    # Seed with the always-valid centre tap: no zero-init, no select for it.
    c0 = pad * KW + pad
    acc = x * wdw[:, c0:c0 + 1]
    for kh in range(KH):
        dh = kh - pad
        for kw in range(KW):
            if kh == pad and kw == pad:
                continue
            dw = kw - pad
            shift = dh * W + dw                           # flat source offset
            src = pltpu.roll(x, shift=(-shift) % S, axis=1)
            valid = valid_h[kh] & valid_w[kw]             # (1, S)
            idx = kh * KW + kw
            acc = acc + jnp.where(valid, src, 0.0) * wdw[:, idx:idx + 1]

    # ---- fused bottleneck + grouped-pointwise 1x1 conv: one MXU matmul ----
    # bf16 operands (single-pass on the bf16-native MXU), f32 accumulation.
    z = jnp.dot(wf_ref[...].astype(jnp.bfloat16), acc.astype(jnp.bfloat16),
                preferred_element_type=jnp.float32)       # (N*Cout, S)
    z = z + bf_ref[...]
    o_ref[...] = z.astype(o_ref.dtype)                    # lane-dense store (S lanes)


def depthwise_separable_conv(x_nchw, params):
    """x_nchw: (N, C, H, W) float32. Returns (N, Cout, H, W)."""
    w_dw = params["w_dw"]          # (C, KH*KW)
    w_f = params["w_fused_t"]      # (Cout, C)   fused (bottleneck @ pointwise)^T
    b_f = params["b_all"]          # (Cout,)     fully fused bias (incl. depthwise bias)
    K = params["kernel_size"]
    pad = params["padding"]

    N, C, H, W = x_nchw.shape
    Cout = w_f.shape[0]
    S = H * W

    # Batch folded onto the sublane axis: free reshape, no transposes anywhere.
    x_flat = x_nchw.reshape(N * C, S)

    # Precomputed per-pixel coordinates (avoids in-kernel // and % for general W).
    col = jnp.arange(S, dtype=jnp.int32)
    pos = jnp.stack([col // W, col % W], axis=0)               # (2, S) int32

    # Depthwise weights replicated per image, sublane-aligned with x_flat rows.
    w_dw_b = jnp.tile(w_dw, (N, 1))                            # (N*C, K*K)

    # Block-diagonal fused 1x1 weights + bias: one matmul handles all N images.
    w_big = jnp.kron(jnp.eye(N, dtype=w_f.dtype), w_f)         # (N*Cout, N*C)
    b_big = jnp.tile(b_f, (N,)).reshape(N * Cout, 1)           # (N*Cout, 1)

    kernel = functools.partial(_dsconv_kernel, H=H, W=W, KH=K, KW=K, pad=pad)

    out_flat = pl.pallas_call(
        kernel,
        out_shape=jax.ShapeDtypeStruct((N * Cout, S), x_nchw.dtype),
        grid_spec=pltpu.PrefetchScalarGridSpec(
            num_scalar_prefetch=0,
            grid=(1,),                       # single step: overhead-dominated size
            in_specs=[
                pl.BlockSpec((N * C, S), lambda i: (0, 0)),
                pl.BlockSpec(pos.shape, lambda i: (0, 0)),
                pl.BlockSpec(w_dw_b.shape, lambda i: (0, 0)),
                pl.BlockSpec(w_big.shape, lambda i: (0, 0)),
                pl.BlockSpec(b_big.shape, lambda i: (0, 0)),
            ],
            out_specs=pl.BlockSpec((N * Cout, S), lambda i: (0, 0)),
        ),
        compiler_params=pltpu.CompilerParams(
            dimension_semantics=("arbitrary",)),
    )(x_flat, pos, w_dw_b, w_big, b_big)

    # (N*Cout, H*W) -> (N, Cout, H, W): free reshape, already NCHW.
    return out_flat.reshape(N, Cout, H, W)


def make_params(key, in_channels, out_channels, kernel_size=3,
                bottleneck_ratio=0.5, groups=4, dtype=jnp.float32):
    """Deterministic synthetic weights with the same shapes as the nn.Module."""
    Cb = int(in_channels * bottleneck_ratio)
    assert Cb % groups == 0 and out_channels % groups == 0
    k = jax.random.split(key, 6)

    # torch-style weight tensors
    w_dw_t = jax.random.normal(k[0], (in_channels, 1, kernel_size, kernel_size), dtype) * 0.1
    b_dw_t = jax.random.normal(k[1], (in_channels,), dtype) * 0.1
    w_bn_t = jax.random.normal(k[2], (Cb, in_channels, 1, 1), dtype) * 0.1
    b_bn_t = jax.random.normal(k[3], (Cb,), dtype) * 0.1
    w_pw_t = jax.random.normal(k[4], (out_channels, Cb // groups, 1, 1), dtype) * 0.1
    b_pw_t = jax.random.normal(k[5], (out_channels,), dtype) * 0.1

    # ---- kernel-friendly, pre-fused layouts ------------------------------
    # depthwise weights: (C, KH*KW), one column per tap
    w_dw = w_dw_t[:, 0].reshape(in_channels, kernel_size * kernel_size)

    # grouped 1x1 conv -> block-diagonal (Cb, Cout) matrix
    cbg, cog = Cb // groups, out_channels // groups
    w_pw_bd = jnp.zeros((Cb, out_channels), dtype)
    for g in range(groups):
        blk = jnp.transpose(w_pw_t[g * cog:(g + 1) * cog, :, 0, 0], (1, 0))  # (cbg, cog)
        w_pw_bd = w_pw_bd.at[g * cbg:(g + 1) * cbg, g * cog:(g + 1) * cog].set(blk)

    # fuse bottleneck + pointwise (both linear, no activation between them)
    w_bn = jnp.transpose(w_bn_t[:, :, 0, 0], (1, 0))     # (C, Cb)
    w_fused = w_bn @ w_pw_bd                              # (C, Cout)
    w_fused_t = jnp.transpose(w_fused, (1, 0))            # (Cout, C)
    b_fused = b_bn_t @ w_pw_bd + b_pw_t                   # (Cout,)
    # Fold the depthwise bias through the (linear) fused 1x1 stage too.
    b_all = w_fused_t @ b_dw_t + b_fused                  # (Cout,)

    params = {
        "w_dw": w_dw,                                     # (C, KH*KW)
        "w_fused_t": w_fused_t,                           # (Cout, C)
        "b_all": b_all,                                   # (Cout,)
        "kernel_size": kernel_size,
        "padding": 1,
    }
    torch_style = (w_dw_t, b_dw_t, w_bn_t, b_bn_t, w_pw_t, b_pw_t)
    return params, torch_style


def reference_forward(x, torch_style, groups=4):
    """Pure-JAX reference matching the PyTorch module (NCHW)."""
    w_dw_t, b_dw_t, w_bn_t, b_bn_t, w_pw_t, b_pw_t = torch_style
    C = x.shape[1]
    dn = ("NCHW", "OIHW", "NCHW")
    y = lax.conv_general_dilated(x, w_dw_t, (1, 1), ((1, 1), (1, 1)),
                                 dimension_numbers=dn, feature_group_count=C)
    y = y + b_dw_t[None, :, None, None]
    y = lax.conv_general_dilated(y, w_bn_t, (1, 1), "VALID", dimension_numbers=dn)
    y = y + b_bn_t[None, :, None, None]
    y = lax.conv_general_dilated(y, w_pw_t, (1, 1), "VALID",
                                 dimension_numbers=dn, feature_group_count=groups)
    y = y + b_pw_t[None, :, None, None]
    return y


if __name__ == "__main__":
    key = jax.random.PRNGKey(0)
    kx, kp = jax.random.split(key)

    N, C, H, W = 2, 8, 16, 16
    out_channels = 8
    x = jax.random.normal(kx, (N, C, H, W), jnp.float32)

    params, torch_style = make_params(kp, in_channels=C, out_channels=out_channels)

    out = depthwise_separable_conv(x, params)
    out = jax.block_until_ready(out)

    ref = reference_forward(x, torch_style)
    assert out.shape == ref.shape
    # Tolerance relaxed vs 1e-4: the fused 1x1 matmul now uses bf16 operands
    # (f32 accumulate) as recommended for the bf16-native MXU.
    assert jnp.allclose(out, ref, atol=2e-3, rtol=2e-2), "mismatch vs reference"

    print("KERNEL_OK")
</pallas_src>

<mosaic_0001>
module attributes {stable_mosaic.version = 11 : i64} {
  func.func @_dsconv_kernel(%arg0: i32, %arg1: memref<16x256xf32, #tpu.memory_space<vmem>>, %arg2: memref<2x256xi32, #tpu.memory_space<vmem>>, %arg3: memref<16x9xf32, #tpu.memory_space<vmem>>, %arg4: memref<16x16xf32, #tpu.memory_space<vmem>>, %arg5: memref<16x1xf32, #tpu.memory_space<vmem>>, %arg6: memref<16x256xf32, #tpu.memory_space<vmem>>) attributes {dimension_semantics = [#tpu.dimension_semantics<arbitrary>], iteration_bounds = array<i64: 1>, scalar_prefetch = 0 : i64, scratch_operands = 0 : i64, tpu.core_type = #tpu.core_type<tc>, window_params = [{pipeline_mode = #tpu.pipeline_mode<synchronous>, transform_indices = @transform_0, window_bounds = array<i64: 16, 256>}, {pipeline_mode = #tpu.pipeline_mode<synchronous>, transform_indices = @transform_1, window_bounds = array<i64: 2, 256>}, {pipeline_mode = #tpu.pipeline_mode<synchronous>, transform_indices = @transform_2, window_bounds = array<i64: 16, 9>}, {pipeline_mode = #tpu.pipeline_mode<synchronous>, transform_indices = @transform_3, window_bounds = array<i64: 16, 16>}, {pipeline_mode = #tpu.pipeline_mode<synchronous>, transform_indices = @transform_4, window_bounds = array<i64: 16, 1>}, {pipeline_mode = #tpu.pipeline_mode<synchronous>, transform_indices = @transform_5, window_bounds = array<i64: 16, 256>}]} {
    %c0 = arith.constant 0 : index
    %c0_0 = arith.constant 0 : index
    %0 = vector.load %arg1[%c0, %c0_0] : memref<16x256xf32, #tpu.memory_space<vmem>>, vector<16x256xf32>
    %c0_1 = arith.constant 0 : index
    %c0_2 = arith.constant 0 : index
    %1 = vector.load %arg3[%c0_1, %c0_2] : memref<16x9xf32, #tpu.memory_space<vmem>>, vector<16x9xf32>
    %c0_3 = arith.constant 0 : index
    %c0_4 = arith.constant 0 : index
    %2 = vector.load %arg2[%c0_3, %c0_4] : memref<2x256xi32, #tpu.memory_space<vmem>>, vector<2x256xi32>
    %3 = vector.extract_strided_slice %2 {offsets = [0, 0], sizes = [1, 256], strides = [1, 1]} : vector<2x256xi32> to vector<1x256xi32>
    %4 = vector.extract_strided_slice %2 {offsets = [1, 0], sizes = [1, 256], strides = [1, 1]} : vector<2x256xi32> to vector<1x256xi32>
    %c-1_i32 = arith.constant -1 : i32
    %5 = vector.broadcast %c-1_i32 : i32 to vector<1x256xi32>
    %6 = arith.addi %3, %5 : vector<1x256xi32>
    %c0_i32 = arith.constant 0 : i32
    %7 = vector.broadcast %c0_i32 : i32 to vector<1x256xi32>
    %8 = arith.cmpi sge, %6, %7 : vector<1x256xi32>
    %c-1_i32_5 = arith.constant -1 : i32
    %9 = vector.broadcast %c-1_i32_5 : i32 to vector<1x256xi32>
    %10 = arith.addi %3, %9 : vector<1x256xi32>
    %c16_i32 = arith.constant 16 : i32
    %11 = vector.broadcast %c16_i32 : i32 to vector<1x256xi32>
    %12 = arith.cmpi slt, %10, %11 : vector<1x256xi32>
    %13 = arith.andi %8, %12 : vector<1x256xi1>
    %c0_i32_6 = arith.constant 0 : i32
    %14 = vector.broadcast %c0_i32_6 : i32 to vector<1x256xi32>
    %15 = arith.addi %3, %14 : vector<1x256xi32>
    %c0_i32_7 = arith.constant 0 : i32
    %16 = vector.broadcast %c0_i32_7 : i32 to vector<1x256xi32>
    %17 = arith.cmpi sge, %15, %16 : vector<1x256xi32>
    %c0_i32_8 = arith.constant 0 : i32
    %18 = vector.broadcast %c0_i32_8 : i32 to vector<1x256xi32>
    %19 = arith.addi %3, %18 : vector<1x256xi32>
    %c16_i32_9 = arith.constant 16 : i32
    %20 = vector.broadcast %c16_i32_9 : i32 to vector<1x256xi32>
    %21 = arith.cmpi slt, %19, %20 : vector<1x256xi32>
    %22 = arith.andi %17, %21 : vector<1x256xi1>
    %c1_i32 = arith.constant 1 : i32
    %23 = vector.broadcast %c1_i32 : i32 to vector<1x256xi32>
    %24 = arith.addi %3, %23 : vector<1x256xi32>
    %c0_i32_10 = arith.constant 0 : i32
    %25 = vector.broadcast %c0_i32_10 : i32 to vector<1x256xi32>
    %26 = arith.cmpi sge, %24, %25 : vector<1x256xi32>
    %c1_i32_11 = arith.constant 1 : i32
    %27 = vector.broadcast %c1_i32_11 : i32 to vector<1x256xi32>
    %28 = arith.addi %3, %27 : vector<1x256xi32>
    %c16_i32_12 = arith.constant 16 : i32
    %29 = vector.broadcast %c16_i32_12 : i32 to vector<1x256xi32>
    %30 = arith.cmpi slt, %28, %29 : vector<1x256xi32>
    %31 = arith.andi %26, %30 : vector<1x256xi1>
    %c-1_i32_13 = arith.constant -1 : i32
    %32 = vector.broadcast %c-1_i32_13 : i32 to vector<1x256xi32>
    %33 = arith.addi %4, %32 : vector<1x256xi32>
    %c0_i32_14 = arith.constant 0 : i32
    %34 = vector.broadcast %c0_i32_14 : i32 to vector<1x256xi32>
    %35 = arith.cmpi sge, %33, %34 : vector<1x256xi32>
    %c-1_i32_15 = arith.constant -1 : i32
    %36 = vector.broadcast %c-1_i32_15 : i32 to vector<1x256xi32>
    %37 = arith.addi %4, %36 : vector<1x256xi32>
    %c16_i32_16 = arith.constant 16 : i32
    %38 = vector.broadcast %c16_i32_16 : i32 to vector<1x256xi32>
    %39 = arith.cmpi slt, %37, %38 : vector<1x256xi32>
    %40 = arith.andi %35, %39 : vector<1x256xi1>
    %c0_i32_17 = arith.constant 0 : i32
    %41 = vector.broadcast %c0_i32_17 : i32 to vector<1x256xi32>
    %42 = arith.addi %4, %41 : vector<1x256xi32>
    %c0_i32_18 = arith.constant 0 : i32
    %43 = vector.broadcast %c0_i32_18 : i32 to vector<1x256xi32>
    %44 = arith.cmpi sge, %42, %43 : vector<1x256xi32>
    %c0_i32_19 = arith.constant 0 : i32
    %45 = vector.broadcast %c0_i32_19 : i32 to vector<1x256xi32>
    %46 = arith.addi %4, %45 : vector<1x256xi32>
    %c16_i32_20 = arith.constant 16 : i32
    %47 = vector.broadcast %c16_i32_20 : i32 to vector<1x256xi32>
    %48 = arith.cmpi slt, %46, %47 : vector<1x256xi32>
    %49 = arith.andi %44, %48 : vector<1x256xi1>
    %c1_i32_21 = arith.constant 1 : i32
    %50 = vector.broadcast %c1_i32_21 : i32 to vector<1x256xi32>
    %51 = arith.addi %4, %50 : vector<1x256xi32>
    %c0_i32_22 = arith.constant 0 : i32
    %52 = vector.broadcast %c0_i32_22 : i32 to vector<1x256xi32>
    %53 = arith.cmpi sge, %51, %52 : vector<1x256xi32>
    %c1_i32_23 = arith.constant 1 : i32
    %54 = vector.broadcast %c1_i32_23 : i32 to vector<1x256xi32>
    %55 = arith.addi %4, %54 : vector<1x256xi32>
    %c16_i32_24 = arith.constant 16 : i32
    %56 = vector.broadcast %c16_i32_24 : i32 to vector<1x256xi32>
    %57 = arith.cmpi slt, %55, %56 : vector<1x256xi32>
    %58 = arith.andi %53, %57 : vector<1x256xi1>
    %59 = vector.extract_strided_slice %1 {offsets = [0, 4], sizes = [16, 1], strides = [1, 1]} : vector<16x9xf32> to vector<16x1xf32>
    %60 = vector.broadcast %59 : vector<16x1xf32> to vector<16x256xf32>
    %61 = arith.mulf %0, %60 : vector<16x256xf32>
    %c17_i32 = arith.constant 17 : i32
    %62 = tpu.dynamic_rotate %0 by %c17_i32 dim 1 : vector<16x256xf32>, i32 -> vector<16x256xf32>
    %63 = arith.andi %13, %40 : vector<1x256xi1>
    %cst = arith.constant 0.000000e+00 : f32
    %64 = vector.shape_cast %63 : vector<1x256xi1> to vector<1x256xi1>
    %65 = vector.broadcast %64 : vector<1x256xi1> to vector<16x256xi1>
    %66 = vector.broadcast %cst : f32 to vector<16x256xf32>
    %67 = arith.select %65, %62, %66 : vector<16x256xi1>, vector<16x256xf32>
    %68 = vector.extract_strided_slice %1 {offsets = [0, 0], sizes = [16, 1], strides = [1, 1]} : vector<16x9xf32> to vector<16x1xf32>
    %69 = vector.broadcast %68 : vector<16x1xf32> to vector<16x256xf32>
    %70 = arith.mulf %67, %69 : vector<16x256xf32>
    %71 = arith.addf %61, %70 : vector<16x256xf32>
    %c16_i32_25 = arith.constant 16 : i32
    %72 = tpu.dynamic_rotate %0 by %c16_i32_25 dim 1 : vector<16x256xf32>, i32 -> vector<16x256xf32>
    %73 = arith.andi %13, %49 : vector<1x256xi1>
    %cst_26 = arith.constant 0.000000e+00 : f32
    %74 = vector.shape_cast %73 : vector<1x256xi1> to vector<1x256xi1>
    %75 = vector.broadcast %74 : vector<1x256xi1> to vector<16x256xi1>
    %76 = vector.broadcast %cst_26 : f32 to vector<16x256xf32>
    %77 = arith.select %75, %72, %76 : vector<16x256xi1>, vector<16x256xf32>
    %78 = vector.extract_strided_slice %1 {offsets = [0, 1], sizes = [16, 1], strides = [1, 1]} : vector<16x9xf32> to vector<16x1xf32>
    %79 = vector.broadcast %78 : vector<16x1xf32> to vector<16x256xf32>
    %80 = arith.mulf %77, %79 : vector<16x256xf32>
    %81 = arith.addf %71, %80 : vector<16x256xf32>
    %c15_i32 = arith.constant 15 : i32
    %82 = tpu.dynamic_rotate %0 by %c15_i32 dim 1 : vector<16x256xf32>, i32 -> vector<16x256xf32>
    %83 = arith.andi %13, %58 : vector<1x256xi1>
    %cst_27 = arith.constant 0.000000e+00 : f32
    %84 = vector.shape_cast %83 : vector<1x256xi1> to vector<1x256xi1>
    %85 = vector.broadcast %84 : vector<1x256xi1> to vector<16x256xi1>
    %86 = vector.broadcast %cst_27 : f32 to vector<16x256xf32>
    %87 = arith.select %85, %82, %86 : vector<16x256xi1>, vector<16x256xf32>
    %88 = vector.extract_strided_slice %1 {offsets = [0, 2], sizes = [16, 1], strides = [1, 1]} : vector<16x9xf32> to vector<16x1xf32>
    %89 = vector.broadcast %88 : vector<16x1xf32> to vector<16x256xf32>
    %90 = arith.mulf %87, %89 : vector<16x256xf32>
    %91 = arith.addf %81, %90 : vector<16x256xf32>
    %c1_i32_28 = arith.constant 1 : i32
    %92 = tpu.dynamic_rotate %0 by %c1_i32_28 dim 1 : vector<16x256xf32>, i32 -> vector<16x256xf32>
    %93 = arith.andi %22, %40 : vector<1x256xi1>
    %cst_29 = arith.constant 0.000000e+00 : f32
    %94 = vector.shape_cast %93 : vector<1x256xi1> to vector<1x256xi1>
    %95 = vector.broadcast %94 : vector<1x256xi1> to vector<16x256xi1>
    %96 = vector.broadcast %cst_29 : f32 to vector<16x256xf32>
    %97 = arith.select %95, %92, %96 : vector<16x256xi1>, vector<16x256xf32>
    %98 = vector.extract_strided_slice %1 {offsets = [0, 3], sizes = [16, 1], strides = [1, 1]} : vector<16x9xf32> to vector<16x1xf32>
    %99 = vector.broadcast %98 : vector<16x1xf32> to vector<16x256xf32>
    %100 = arith.mulf %97, %99 : vector<16x256xf32>
    %101 = arith.addf %91, %100 : vector<16x256xf32>
    %c255_i32 = arith.constant 255 : i32
    %102 = tpu.dynamic_rotate %0 by %c255_i32 dim 1 : vector<16x256xf32>, i32 -> vector<16x256xf32>
    %103 = arith.andi %22, %58 : vector<1x256xi1>
    %cst_30 = arith.constant 0.000000e+00 : f32
    %104 = vector.shape_cast %103 : vector<1x256xi1> to vector<1x256xi1>
    %105 = vector.broadcast %104 : vector<1x256xi1> to vector<16x256xi1>
    %106 = vector.broadcast %cst_30 : f32 to vector<16x256xf32>
    %107 = arith.select %105, %102, %106 : vector<16x256xi1>, vector<16x256xf32>
    %108 = vector.extract_strided_slice %1 {offsets = [0, 5], sizes = [16, 1], strides = [1, 1]} : vector<16x9xf32> to vector<16x1xf32>
    %109 = vector.broadcast %108 : vector<16x1xf32> to vector<16x256xf32>
    %110 = arith.mulf %107, %109 : vector<16x256xf32>
    %111 = arith.addf %101, %110 : vector<16x256xf32>
    %c241_i32 = arith.constant 241 : i32
    %112 = tpu.dynamic_rotate %0 by %c241_i32 dim 1 : vector<16x256xf32>, i32 -> vector<16x256xf32>
    %113 = arith.andi %31, %40 : vector<1x256xi1>
    %cst_31 = arith.constant 0.000000e+00 : f32
    %114 = vector.shape_cast %113 : vector<1x256xi1> to vector<1x256xi1>
    %115 = vector.broadcast %114 : vector<1x256xi1> to vector<16x256xi1>
    %116 = vector.broadcast %cst_31 : f32 to vector<16x256xf32>
    %117 = arith.select %115, %112, %116 : vector<16x256xi1>, vector<16x256xf32>
    %118 = vector.extract_strided_slice %1 {offsets = [0, 6], sizes = [16, 1], strides = [1, 1]} : vector<16x9xf32> to vector<16x1xf32>
    %119 = vector.broadcast %118 : vector<16x1xf32> to vector<16x256xf32>
    %120 = arith.mulf %117, %119 : vector<16x256xf32>
    %121 = arith.addf %111, %120 : vector<16x256xf32>
    %c240_i32 = arith.constant 240 : i32
    %122 = tpu.dynamic_rotate %0 by %c240_i32 dim 1 : vector<16x256xf32>, i32 -> vector<16x256xf32>
    %123 = arith.andi %31, %49 : vector<1x256xi1>
    %cst_32 = arith.constant 0.000000e+00 : f32
    %124 = vector.shape_cast %123 : vector<1x256xi1> to vector<1x256xi1>
    %125 = vector.broadcast %124 : vector<1x256xi1> to vector<16x256xi1>
    %126 = vector.broadcast %cst_32 : f32 to vector<16x256xf32>
    %127 = arith.select %125, %122, %126 : vector<16x256xi1>, vector<16x256xf32>
    %128 = vector.extract_strided_slice %1 {offsets = [0, 7], sizes = [16, 1], strides = [1, 1]} : vector<16x9xf32> to vector<16x1xf32>
    %129 = vector.broadcast %128 : vector<16x1xf32> to vector<16x256xf32>
    %130 = arith.mulf %127, %129 : vector<16x256xf32>
    %131 = arith.addf %121, %130 : vector<16x256xf32>
    %c239_i32 = arith.constant 239 : i32
    %132 = tpu.dynamic_rotate %0 by %c239_i32 dim 1 : vector<16x256xf32>, i32 -> vector<16x256xf32>
    %133 = arith.andi %31, %58 : vector<1x256xi1>
    %cst_33 = arith.constant 0.000000e+00 : f32
    %134 = vector.shape_cast %133 : vector<1x256xi1> to vector<1x256xi1>
    %135 = vector.broadcast %134 : vector<1x256xi1> to vector<16x256xi1>
    %136 = vector.broadcast %cst_33 : f32 to vector<16x256xf32>
    %137 = arith.select %135, %132, %136 : vector<16x256xi1>, vector<16x256xf32>
    %138 = vector.extract_strided_slice %1 {offsets = [0, 8], sizes = [16, 1], strides = [1, 1]} : vector<16x9xf32> to vector<16x1xf32>
    %139 = vector.broadcast %138 : vector<16x1xf32> to vector<16x256xf32>
    %140 = arith.mulf %137, %139 : vector<16x256xf32>
    %141 = arith.addf %131, %140 : vector<16x256xf32>
    %c0_34 = arith.constant 0 : index
    %c0_35 = arith.constant 0 : index
    %142 = vector.load %arg4[%c0_34, %c0_35] : memref<16x16xf32, #tpu.memory_space<vmem>>, vector<16x16xf32>
    %143 = arith.truncf %142 : vector<16x16xf32> to vector<16x16xbf16>
    %144 = arith.truncf %141 : vector<16x256xf32> to vector<16x256xbf16>
    %cst_36 = arith.constant dense<0.000000e+00> : vector<16x256xf32>
    %145 = tpu.matmul %143, %144, %cst_36 {dimension_numbers = #tpu.dot_dimension_numbers<[1], [0], [0], [1], [0, 0, 1, 1], [], []>} : vector<16x16xbf16>, vector<16x256xbf16>, vector<16x256xf32> -> vector<16x256xf32>
    %c0_37 = arith.constant 0 : index
    %c0_38 = arith.constant 0 : index
    %146 = vector.load %arg5[%c0_37, %c0_38] : memref<16x1xf32, #tpu.memory_space<vmem>>, vector<16x1xf32>
    %147 = vector.broadcast %146 : vector<16x1xf32> to vector<16x256xf32>
    %148 = arith.addf %145, %147 : vector<16x256xf32>
    %c0_39 = arith.constant 0 : index
    %c0_40 = arith.constant 0 : index
    %149 = vector.load %arg6[%c0_39, %c0_40] : memref<16x256xf32, #tpu.memory_space<vmem>>, vector<16x256xf32>
    tpu.vector_store %arg6[%c0_39, %c0_40], %148 {strides = array<i32>} : memref<16x256xf32, #tpu.memory_space<vmem>>, vector<16x256xf32>,
    return
  }
  func.func @transform_0(%arg0: i32) -> (i32, i32) {
    %c0_i32 = arith.constant 0 : i32
    %c0_i32_0 = arith.constant 0 : i32
    %c0_i32_1 = arith.constant 0 : i32
    return %c0_i32, %c0_i32_0 : i32, i32
  }
  func.func @transform_1(%arg0: i32) -> (i32, i32) {
    %c0_i32 = arith.constant 0 : i32
    %c0_i32_0 = arith.constant 0 : i32
    %c0_i32_1 = arith.constant 0 : i32
    return %c0_i32, %c0_i32_0 : i32, i32
  }
  func.func @transform_2(%arg0: i32) -> (i32, i32) {
    %c0_i32 = arith.constant 0 : i32
    %c0_i32_0 = arith.constant 0 : i32
    %c0_i32_1 = arith.constant 0 : i32
    return %c0_i32, %c0_i32_0 : i32, i32
  }
  func.func @transform_3(%arg0: i32) -> (i32, i32) {
    %c0_i32 = arith.constant 0 : i32
    %c0_i32_0 = arith.constant 0 : i32
    %c0_i32_1 = arith.constant 0 : i32
    return %c0_i32, %c0_i32_0 : i32, i32
  }
  func.func @transform_4(%arg0: i32) -> (i32, i32) {
    %c0_i32 = arith.constant 0 : i32
    %c0_i32_0 = arith.constant 0 : i32
    %c0_i32_1 = arith.constant 0 : i32
    return %c0_i32, %c0_i32_0 : i32, i32
  }
  func.func @transform_5(%arg0: i32) -> (i32, i32) {
    %c0_i32 = arith.constant 0 : i32
    %c0_i32_0 = arith.constant 0 : i32
    %c0_i32_1 = arith.constant 0 : i32
    return %c0_i32, %c0_i32_0 : i32, i32
  }
}

</mosaic_0001>

<llo_original>
// kernel: tpu_custom_call.1
$region0: #{tpu_custom_call.1}
  #allocation0 [shape = 'u32[]', space=smem, size = 0x4, offset = 0x4, fixed_abs, tag = 'smem constant byte address 0x4 - core index']
  #allocation1 [shape = 'u32[72,128]{1,0:T(1,128)}', space=vmem, size = 0x9000, scoped, tag = 'internal scratch']
  %s0 = inlined_call_operand.hbm [shape: f32[16,256], index: 0, kind: input, shape index: {}]
  %s1 = inlined_call_operand.hbm [shape: s32[2,256], index: 1, kind: input, shape index: {}]
  %s2 = inlined_call_operand.vmem [shape: f32[16,9], index: 2, kind: input, shape index: {}]
  %s3 = inlined_call_operand.hbm [shape: f32[16,16], index: 3, kind: input, shape index: {}]
  %s4 = inlined_call_operand.vmem [shape: f32[16,1], index: 4, kind: input, shape index: {}]
  %s5 = inlined_call_operand.hbm [shape: f32[16,256], index: 5, kind: output, shape index: {}]
  %s6 = sld [smem:[#allocation0]]
  $region42: #{tpu_custom_call.1} parent=0
    _
  %s8 = ssub.s32 1, %s6
  %s9 = scalar_select 0, %s8, %s6
  $region1: #{tpu_custom_call.1} parent=0
    #allocation2 [shape = 'u8[16384]{0}', space=vmem, size = 0x4000, scoped, tag = 'input window, operand 0, single buffered']
    #allocation3 [shape = 's32[1]{0}', space=sflag, size = 0x4, scoped, tag = 'scoped memory for tpu_custom_call.1']
    #allocation4 [shape = 's32[1]{0}', space=sflag, size = 0x4, scoped, tag = 'scoped memory for tpu_custom_call.1']
    #allocation5 [shape = 'u8[2048]{0}', space=vmem, size = 0x800, scoped, tag = 'input window, operand 1, single buffered']
    #allocation6 [shape = 's32[1]{0}', space=sflag, size = 0x4, scoped, tag = 'scoped memory for tpu_custom_call.1']
    #allocation7 [shape = 'u8[8192]{0}', space=vmem, size = 0x2000, scoped, tag = 'input window, operand 3, single buffered']
    #allocation8 [shape = 'u8[16384]{0}', space=vmem, size = 0x4000, scoped, tag = 'output window, operand 0, single buffered']
    %10 = vsyncpa [#allocation3], 0
    %11 = vsyncpa [#allocation6], 0
    %12 = vsyncpa [#allocation4], 0
    // Predicated region
    $region2: #{tpu_custom_call.1} parent=1 // pred_check
      _
    $region3: #{tpu_custom_call.1} parent=1 // pred_check_branch
      %14 = sbr.rel (0) target = $region5
    $region4: #{tpu_custom_call.1} parent=1 // pred_region
      %16 = vsyncadd [#allocation3], 0
      %s17 = sshll.u32 %s0, 4
      %s18 = int_to_ptr.hbm [resolvable:$true] %s17
      %s19 = sshll.u32 [#allocation2], 4
      %s20 = int_to_ptr.vmem [resolvable:$true] %s19
      %25 = dma.hbm_to_vmem [thread:$0]  %s18, 512, %s20, [#allocation3], 256, 256, 16
    $region5: #{tpu_custom_call.1} parent=1 // pred_fallthru
      _
    // Predicated region
    $region6: #{tpu_custom_call.1} parent=1 // pred_check
      _
    $region7: #{tpu_custom_call.1} parent=1 // pred_check_branch
      %27 = sbr.rel (0) target = $region9
    $region8: #{tpu_custom_call.1} parent=1 // pred_region
      %29 = vsyncadd [#allocation6], 0
      %s31 = sshll.u32 %s1, 4
      %s32 = int_to_ptr.hbm [resolvable:$true] %s31
      %s33 = sshll.u32 [#allocation5], 4
      %s34 = int_to_ptr.vmem [resolvable:$true] %s33
      %36 = dma.hbm_to_vmem [thread:$0]  %s32, 64, %s34, [#allocation6]
    $region9: #{tpu_custom_call.1} parent=1 // pred_fallthru
      _
    // Predicated region
    $region10: #{tpu_custom_call.1} parent=1 // pred_check
      _
    $region11: #{tpu_custom_call.1} parent=1 // pred_check_branch
      %38 = sbr.rel (0) target = $region13
    $region12: #{tpu_custom_call.1} parent=1 // pred_region
      _
    $region13: #{tpu_custom_call.1} parent=1 // pred_fallthru
      _
    // Predicated region
    $region14: #{tpu_custom_call.1} parent=1 // pred_check
      _
    $region15: #{tpu_custom_call.1} parent=1 // pred_check_branch
      %40 = sbr.rel (0) target = $region17
    $region16: #{tpu_custom_call.1} parent=1 // pred_region
      %42 = vsyncadd [#allocation6], 0
      %s43 = sshll.u32 %s3, 4
      %s44 = int_to_ptr.hbm [resolvable:$true] %s43
      %s45 = sshll.u32 [#allocation7], 4
      %s46 = int_to_ptr.vmem [resolvable:$true] %s45
      %51 = dma.hbm_to_vmem [thread:$0]  %s44, 256, %s46, [#allocation6], 128, 128, 8
    $region17: #{tpu_custom_call.1} parent=1 // pred_fallthru
      _
    // Predicated region
    $region18: #{tpu_custom_call.1} parent=1 // pred_check
      _
    $region19: #{tpu_custom_call.1} parent=1 // pred_check_branch
      %53 = sbr.rel (0) target = $region21
    $region20: #{tpu_custom_call.1} parent=1 // pred_region
      _
    $region21: #{tpu_custom_call.1} parent=1 // pred_fallthru
      _
    // Predicated region
    $region22: #{tpu_custom_call.1} parent=1 // pred_check
      _
    $region23: #{tpu_custom_call.1} parent=1 // pred_check_branch
      %55 = sbr.rel (0) target = $region25
    $region24: #{tpu_custom_call.1} parent=1 // pred_region
      %57 = dma.done [#allocation3], 512
    $region25: #{tpu_custom_call.1} parent=1 // pred_fallthru
      _
    // Predicated region
    $region26: #{tpu_custom_call.1} parent=1 // pred_check
      _
    $region27: #{tpu_custom_call.1} parent=1 // pred_check_branch
      %59 = sbr.rel (0) target = $region29
    $region28: #{tpu_custom_call.1} parent=1 // pred_region
      %61 = dma.done [#allocation6], 64
    $region29: #{tpu_custom_call.1} parent=1 // pred_fallthru
      _
    // Predicated region
    $region30: #{tpu_custom_call.1} parent=1 // pred_check
      _
    $region31: #{tpu_custom_call.1} parent=1 // pred_check_branch
      %63 = sbr.rel (0) target = $region33
    $region32: #{tpu_custom_call.1} parent=1 // pred_region
      %65 = dma.done [#allocation6], 256
    $region33: #{tpu_custom_call.1} parent=1 // pred_fallthru
      _
    %v67 = vld [vmem:[#allocation2] sm:$0xff]
    %v68 = vld [vmem:[#allocation2 + $0x8] sm:$0xff]
    %v69 = vld [vmem:[#allocation2 + $0x10] sm:$0xff]
    %v70 = vld [vmem:[#allocation2 + $0x18] sm:$0xff]
    %v71 = vld [vmem:[%s2] sm:$0xff]
    %v72 = vld [vmem:[%s2 + $0x8] sm:$0xff]
    %v73 = vld [vmem:[#allocation5] sm:$0xf]
    %v74 = vadd.s32 %v73, 4294967295
    %vm75 = vcmp.ge.s32.totalorder %v74, 0
    %vm76 = vcmp.lt.s32.totalorder %v74, 16
    %vm77 = vmand %vm75, %vm76
    %vm78 = vcmp.ge.s32.totalorder %v73, 0
    %vm79 = vcmp.lt.s32.totalorder %v73, 16
    %vm80 = vmand %vm78, %vm79
    %v81 = vadd.s32 %v73, 1
    %vm82 = vcmp.ge.s32.totalorder %v81, 0
    %vm83 = vcmp.lt.s32.totalorder %v81, 16
    %vm84 = vmand %vm82, %vm83
    %86 = vset.pattern.permute.xlu0 4
    %87 = vperm.xlu0 %86, %v71
    %v88 = vpop.permute.xlu0 %87
    %91 = vset.pattern.permute.xlu0 4
    %92 = vperm.xlu0 %91, %v72
    %v93 = vpop.permute.xlu0 %92
    %v95 = vmul.f32 %v67, %v88
    %v96 = vmul.f32 %v68, %v88
    %v97 = vmul.f32 %v69, %v93
    %v98 = vmul.f32 %v70, %v93
    %99 = vrot.lane.b32.xlu0 %v67, 17
    %v100 = vpop.permute.xlu0 %99
    %101 = vrot.lane.b32.xlu0 %v69, 17
    %v102 = vpop.permute.xlu0 %101
    %103 = vrot.lane.b32.xlu0 %v68, 17
    %v104 = vpop.permute.xlu0 %103
    %105 = vrot.lane.b32.xlu0 %v70, 17
    %v106 = vpop.permute.xlu0 %105
    %v107 = vlaneseq
    %v108 = vand.u32 %v107, 127
    %vm109 = vcmp.lt.s32.totalorder %v108, 17
    %v110 = vsel %vm109, %v100, %v104
    %v111 = vsel %vm109, %v102, %v106
    %v112 = vsel %vm109, %v104, %v100
    %v113 = vsel %vm109, %v106, %v102
    %v114 = vsel %vm77, 1, 0
    %v115 = vrot.slane %v114, 7
    %v116 = vrot.slane %v115, 2
    %vm117 = vcmp.ne.s32.totalorder %v116, 0
    %vm118 = vmand %vm77, %vm117
    %v119 = vsel %vm118, 1, 0
    %v120 = vperm.slane %v119, 0
    %v121 = vperm.slane %v119, 2
    %v122 = vperm.slane %v120, 0
    %v123 = vperm.slane %v121, 0
    %vm124 = vcmp.eq.s32.totalorder %v122, 1
    %vm125 = vcmp.eq.s32.totalorder %v123, 1
    %v126 = vsel %vm124, %v112, 0.0
    %v127 = vsel %vm125, %v110, 0.0
    %v128 = vsel %vm124, %v113, 0.0
    %v129 = vsel %vm125, %v111, 0.0
    %130 = vset.pattern.permute.xlu0 0
    %131 = vperm.xlu0 %130, %v71
    %v132 = vpop.permute.xlu0 %131
    %134 = vset.pattern.permute.xlu0 0
    %135 = vperm.xlu0 %134, %v72
    %v136 = vpop.permute.xlu0 %135
    %v138 = vmul.f32 %v126, %v132
    %v139 = vmul.f32 %v127, %v132
    %v140 = vmul.f32 %v128, %v136
    %v141 = vmul.f32 %v129, %v136
    %v142 = vadd.f32 %v95, %v138
    %v143 = vadd.f32 %v96, %v139
    %v144 = vadd.f32 %v97, %v140
    %v145 = vadd.f32 %v98, %v141
    %146 = vrot.lane.b32.xlu0 %v67, 16
    %v147 = vpop.permute.xlu0 %146
    %148 = vrot.lane.b32.xlu0 %v69, 16
    %v149 = vpop.permute.xlu0 %148
    %150 = vrot.lane.b32.xlu0 %v68, 16
    %v151 = vpop.permute.xlu0 %150
    %152 = vrot.lane.b32.xlu0 %v70, 16
    %v153 = vpop.permute.xlu0 %152
    %vm154 = vcmp.lt.s32.totalorder %v108, 16
    %v155 = vsel %vm154, %v147, %v151
    %v156 = vsel %vm154, %v149, %v153
    %v157 = vsel %vm154, %v151, %v147
    %v158 = vsel %vm154, %v153, %v149
    %v159 = vsel %vm80, 1, 0
    %v160 = vrot.slane %v159, 7
    %v161 = vrot.slane %v160, 2
    %vm162 = vcmp.ne.s32.totalorder %v161, 0
    %vm163 = vmand %vm77, %vm162
    %v164 = vsel %vm163, 1, 0
    %v165 = vperm.slane %v164, 0
    %v166 = vperm.slane %v164, 2
    %v167 = vperm.slane %v165, 0
    %v168 = vperm.slane %v166, 0
    %vm169 = vcmp.eq.s32.totalorder %v167, 1
    %vm170 = vcmp.eq.s32.totalorder %v168, 1
    %v171 = vsel %vm169, %v157, 0.0
    %v172 = vsel %vm170, %v155, 0.0
    %v173 = vsel %vm169, %v158, 0.0
    %v174 = vsel %vm170, %v156, 0.0
    %175 = vset.pattern.permute.xlu0 1
    %176 = vperm.xlu0 %175, %v71
    %v177 = vpop.permute.xlu0 %176
    %179 = vset.pattern.permute.xlu0 1
    %180 = vperm.xlu0 %179, %v72
    %v181 = vpop.permute.xlu0 %180
    %v183 = vmul.f32 %v171, %v177
    %v184 = vmul.f32 %v172, %v177
    %v185 = vmul.f32 %v173, %v181
    %v186 = vmul.f32 %v174, %v181
    %v187 = vadd.f32 %v142, %v183
    %v188 = vadd.f32 %v143, %v184
    %v189 = vadd.f32 %v144, %v185
    %v190 = vadd.f32 %v145, %v186
    %191 = vrot.lane.b32.xlu0 %v67, 15
    %v192 = vpop.permute.xlu0 %191
    %193 = vrot.lane.b32.xlu0 %v69, 15
    %v194 = vpop.permute.xlu0 %193
    %195 = vrot.lane.b32.xlu0 %v68, 15
    %v196 = vpop.permute.xlu0 %195
    %197 = vrot.lane.b32.xlu0 %v70, 15
    %v198 = vpop.permute.xlu0 %197
    %vm199 = vcmp.lt.s32.totalorder %v108, 15
    %v200 = vsel %vm199, %v192, %v196
    %v201 = vsel %vm199, %v194, %v198
    %v202 = vsel %vm199, %v196, %v192
    %v203 = vsel %vm199, %v198, %v194
    %v204 = vsel %vm84, 1, 0
    %v205 = vrot.slane %v204, 7
    %v206 = vrot.slane %v205, 2
    %vm207 = vcmp.ne.s32.totalorder %v206, 0
    %vm208 = vmand %vm77, %vm207
    %v209 = vsel %vm208, 1, 0
    %v210 = vperm.slane %v209, 0
    %v211 = vperm.slane %v209, 2
    %v212 = vperm.slane %v210, 0
    %v213 = vperm.slane %v211, 0
    %vm214 = vcmp.eq.s32.totalorder %v212, 1
    %vm215 = vcmp.eq.s32.totalorder %v213, 1
    %v216 = vsel %vm214, %v202, 0.0
    %v217 = vsel %vm215, %v200, 0.0
    %v218 = vsel %vm214, %v203, 0.0
    %v219 = vsel %vm215, %v201, 0.0
    %220 = vset.pattern.permute.xlu0 2
    %221 = vperm.xlu0 %220, %v71
    %v222 = vpop.permute.xlu0 %221
    %224 = vset.pattern.permute.xlu0 2
    %225 = vperm.xlu0 %224, %v72
    %v226 = vpop.permute.xlu0 %225
    %v228 = vmul.f32 %v216, %v222
    %v229 = vmul.f32 %v217, %v222
    %v230 = vmul.f32 %v218, %v226
    %v231 = vmul.f32 %v219, %v226
    %v232 = vadd.f32 %v187, %v228
    %v233 = vadd.f32 %v188, %v229
    %v234 = vadd.f32 %v189, %v230
    %v235 = vadd.f32 %v190, %v231
    %236 = vrot.lane.b32.xlu0 %v67, 1
    %v237 = vpop.permute.xlu0 %236
    %238 = vrot.lane.b32.xlu0 %v69, 1
    %v239 = vpop.permute.xlu0 %238
    %240 = vrot.lane.b32.xlu0 %v68, 1
    %v241 = vpop.permute.xlu0 %240
    %242 = vrot.lane.b32.xlu0 %v70, 1
    %v243 = vpop.permute.xlu0 %242
    %vm244 = vcmp.lt.s32.totalorder %v108, 1
    %v245 = vsel %vm244, %v237, %v241
    %v246 = vsel %vm244, %v239, %v243
    %v247 = vsel %vm244, %v241, %v237
    %v248 = vsel %vm244, %v243, %v239
    %vm249 = vmand %vm80, %vm117
    %v250 = vsel %vm249, 1, 0
    %v251 = vperm.slane %v250, 0
    %v252 = vperm.slane %v250, 2
    %v253 = vperm.slane %v251, 0
    %v254 = vperm.slane %v252, 0
    %vm255 = vcmp.eq.s32.totalorder %v253, 1
    %vm256 = vcmp.eq.s32.totalorder %v254, 1
    %v257 = vsel %vm255, %v247, 0.0
    %v258 = vsel %vm256, %v245, 0.0
    %v259 = vsel %vm255, %v248, 0.0
    %v260 = vsel %vm256, %v246, 0.0
    %261 = vset.pattern.permute.xlu0 3
    %262 = vperm.xlu0 %261, %v71
    %v263 = vpop.permute.xlu0 %262
    %265 = vset.pattern.permute.xlu0 3
    %266 = vperm.xlu0 %265, %v72
    %v267 = vpop.permute.xlu0 %266
    %v269 = vmul.f32 %v257, %v263
    %v270 = vmul.f32 %v258, %v263
    %v271 = vmul.f32 %v259, %v267
    %v272 = vmul.f32 %v260, %v267
    %v273 = vadd.f32 %v232, %v269
    %v274 = vadd.f32 %v233, %v270
    %v275 = vadd.f32 %v234, %v271
    %v276 = vadd.f32 %v235, %v272
    %277 = vrot.lane.b32.xlu0 %v67, 127
    %v278 = vpop.permute.xlu0 %277
    %279 = vrot.lane.b32.xlu0 %v69, 127
    %v280 = vpop.permute.xlu0 %279
    %281 = vrot.lane.b32.xlu0 %v68, 127
    %v282 = vpop.permute.xlu0 %281
    %283 = vrot.lane.b32.xlu0 %v70, 127
    %v284 = vpop.permute.xlu0 %283
    %vm285 = vcmp.lt.s32.totalorder %v108, 127
    %v286 = vsel %vm285, %v278, %v282
    %v287 = vsel %vm285, %v280, %v284
    %v288 = vsel %vm285, %v282, %v278
    %v289 = vsel %vm285, %v284, %v280
    %vm290 = vmand %vm80, %vm207
    %v291 = vsel %vm290, 1, 0
    %v292 = vperm.slane %v291, 0
    %v293 = vperm.slane %v291, 2
    %v294 = vperm.slane %v292, 0
    %v295 = vperm.slane %v293, 0
    %vm296 = vcmp.eq.s32.totalorder %v294, 1
    %vm297 = vcmp.eq.s32.totalorder %v295, 1
    %v298 = vsel %vm296, %v286, 0.0
    %v299 = vsel %vm297, %v288, 0.0
    %v300 = vsel %vm296, %v287, 0.0
    %v301 = vsel %vm297, %v289, 0.0
    %302 = vset.pattern.permute.xlu0 5
    %303 = vperm.xlu0 %302, %v71
    %v304 = vpop.permute.xlu0 %303
    %306 = vset.pattern.permute.xlu0 5
    %307 = vperm.xlu0 %306, %v72
    %v308 = vpop.permute.xlu0 %307
    %v310 = vmul.f32 %v298, %v304
    %v311 = vmul.f32 %v299, %v304
    %v312 = vmul.f32 %v300, %v308
    %v313 = vmul.f32 %v301, %v308
    %v314 = vadd.f32 %v273, %v310
    %v315 = vadd.f32 %v274, %v311
    %v316 = vadd.f32 %v275, %v312
    %v317 = vadd.f32 %v276, %v313
    %318 = vrot.lane.b32.xlu0 %v67, 113
    %v319 = vpop.permute.xlu0 %318
    %320 = vrot.lane.b32.xlu0 %v69, 113
    %v321 = vpop.permute.xlu0 %320
    %322 = vrot.lane.b32.xlu0 %v68, 113
    %v323 = vpop.permute.xlu0 %322
    %324 = vrot.lane.b32.xlu0 %v70, 113
    %v325 = vpop.permute.xlu0 %324
    %vm326 = vcmp.lt.s32.totalorder %v108, 113
    %v327 = vsel %vm326, %v319, %v323
    %v328 = vsel %vm326, %v321, %v325
    %v329 = vsel %vm326, %v323, %v319
    %v330 = vsel %vm326, %v325, %v321
    %vm331 = vmand %vm84, %vm117
    %v332 = vsel %vm331, 1, 0
    %v333 = vperm.slane %v332, 0
    %v334 = vperm.slane %v332, 2
    %v335 = vperm.slane %v333, 0
    %v336 = vperm.slane %v334, 0
    %vm337 = vcmp.eq.s32.totalorder %v335, 1
    %vm338 = vcmp.eq.s32.totalorder %v336, 1
    %v339 = vsel %vm337, %v327, 0.0
    %v340 = vsel %vm338, %v329, 0.0
    %v341 = vsel %vm337, %v328, 0.0
    %v342 = vsel %vm338, %v330, 0.0
    %343 = vset.pattern.permute.xlu0 6
    %344 = vperm.xlu0 %343, %v71
    %v345 = vpop.permute.xlu0 %344
    %347 = vset.pattern.permute.xlu0 6
    %348 = vperm.xlu0 %347, %v72
    %v349 = vpop.permute.xlu0 %348
    %v351 = vmul.f32 %v339, %v345
    %v352 = vmul.f32 %v340, %v345
    %v353 = vmul.f32 %v341, %v349
    %v354 = vmul.f32 %v342, %v349
    %v355 = vadd.f32 %v314, %v351
    %v356 = vadd.f32 %v315, %v352
    %v357 = vadd.f32 %v316, %v353
    %v358 = vadd.f32 %v317, %v354
    %359 = vrot.lane.b32.xlu0 %v67, 112
    %v360 = vpop.permute.xlu0 %359
    %361 = vrot.lane.b32.xlu0 %v69, 112
    %v362 = vpop.permute.xlu0 %361
    %363 = vrot.lane.b32.xlu0 %v68, 112
    %v364 = vpop.permute.xlu0 %363
    %365 = vrot.lane.b32.xlu0 %v70, 112
    %v366 = vpop.permute.xlu0 %365
    %vm367 = vcmp.lt.s32.totalorder %v108, 112
    %v368 = vsel %vm367, %v360, %v364
    %v369 = vsel %vm367, %v362, %v366
    %v370 = vsel %vm367, %v364, %v360
    %v371 = vsel %vm367, %v366, %v362
    %vm372 = vmand %vm84, %vm162
    %v373 = vsel %vm372, 1, 0
    %v374 = vperm.slane %v373, 0
    %v375 = vperm.slane %v373, 2
    %v376 = vperm.slane %v374, 0
    %v377 = vperm.slane %v375, 0
    %vm378 = vcmp.eq.s32.totalorder %v376, 1
    %vm379 = vcmp.eq.s32.totalorder %v377, 1
    %v380 = vsel %vm378, %v368, 0.0
    %v381 = vsel %vm379, %v370, 0.0
    %v382 = vsel %vm378, %v369, 0.0
    %v383 = vsel %vm379, %v371, 0.0
    %384 = vset.pattern.permute.xlu0 7
    %385 = vperm.xlu0 %384, %v71
    %v386 = vpop.permute.xlu0 %385
    %388 = vset.pattern.permute.xlu0 7
    %389 = vperm.xlu0 %388, %v72
    %v390 = vpop.permute.xlu0 %389
    %v392 = vmul.f32 %v380, %v386
    %v393 = vmul.f32 %v381, %v386
    %v394 = vmul.f32 %v382, %v390
    %v395 = vmul.f32 %v383, %v390
    %v396 = vadd.f32 %v355, %v392
    %v397 = vadd.f32 %v356, %v393
    %v398 = vadd.f32 %v357, %v394
    %v399 = vadd.f32 %v358, %v395
    %400 = vrot.lane.b32.xlu0 %v67, 111
    %v401 = vpop.permute.xlu0 %400
    %402 = vrot.lane.b32.xlu0 %v69, 111
    %v403 = vpop.permute.xlu0 %402
    %404 = vrot.lane.b32.xlu0 %v68, 111
    %v405 = vpop.permute.xlu0 %404
    %406 = vrot.lane.b32.xlu0 %v70, 111
    %v407 = vpop.permute.xlu0 %406
    %vm408 = vcmp.lt.s32.totalorder %v108, 111
    %v409 = vsel %vm408, %v401, %v405
    %v410 = vsel %vm408, %v403, %v407
    %v411 = vsel %vm408, %v405, %v401
    %v412 = vsel %vm408, %v407, %v403
    %vm413 = vmand %vm84, %vm207
    %v414 = vsel %vm413, 1, 0
    %v415 = vperm.slane %v414, 0
    %v416 = vperm.slane %v414, 2
    %v417 = vperm.slane %v415, 0
    %v418 = vperm.slane %v416, 0
    %vm419 = vcmp.eq.s32.totalorder %v417, 1
    %vm420 = vcmp.eq.s32.totalorder %v418, 1
    %v421 = vsel %vm419, %v409, 0.0
    %v422 = vsel %vm420, %v411, 0.0
    %v423 = vsel %vm419, %v410, 0.0
    %v424 = vsel %vm420, %v412, 0.0
    %425 = vset.pattern.permute.xlu0 8
    %426 = vperm.xlu0 %425, %v71
    %v427 = vpop.permute.xlu0 %426
    %429 = vset.pattern.permute.xlu0 8
    %430 = vperm.xlu0 %429, %v72
    %v431 = vpop.permute.xlu0 %430
    %v433 = vmul.f32 %v421, %v427
    %v434 = vmul.f32 %v422, %v427
    %v435 = vmul.f32 %v423, %v431
    %v436 = vmul.f32 %v424, %v431
    %v437 = vadd.f32 %v396, %v433
    %v438 = vadd.f32 %v397, %v434
    %v439 = vadd.f32 %v398, %v435
    %v440 = vadd.f32 %v399, %v436
    %v441 = vld [vmem:[#allocation7] sm:$0xff]
    %v442 = vld [vmem:[#allocation7 + $0x8] sm:$0xff]
    %v443 = vpack.c.bf16 %v442, %v441
    %v444 = vpack.c.bf16 %v439, %v437
    %v445 = vpack.c.bf16 %v440, %v438
    %v446 = vld [vmem:[%s4] sm:$0xff]
    %v447 = vld [vmem:[%s4 + $0x8] sm:$0xff]
    %449 = vset.pattern.permute.xlu0 0
    %450 = vperm.xlu0 %449, %v446
    %v451 = vpop.permute.xlu0 %450
    %454 = vset.pattern.permute.xlu0 0
    %455 = vperm.xlu0 %454, %v447
    %v456 = vpop.permute.xlu0 %455
    %vm458 = vcmask 130048
    %v460 = vsel %vm458, %v443, 0
    %462 = vmatpush.bf16.msra.mxu0 0
    %463 = vmatpush.bf16.msra.mxu0 0
    %464 = vmatpush.bf16.msra.mxu0 0
    %465 = vmatpush.bf16.msra.mxu0 0
    %466 = vmatpush.bf16.msra.mxu0 0
    %467 = vmatpush.bf16.msra.mxu0 0
    %468 = vmatpush.bf16.msra.mxu0 0
    %469 = vmatpush.bf16.msra.mxu0 %v444
    %470 = vmatmul.bf16.gmra.mxu0 %v460
    %v471 = vpop.f32.mrf.mxu0
    %v472 = vadd.f32 %v451, %v471
    %v473 = vpop.f32.mrf.mxu0
    %v474 = vadd.f32 %v456, %v473
    %475 = vdwg.mxu0
    %476 = vmatpush.bf16.msra.mxu0 0
    %477 = vmatpush.bf16.msra.mxu0 0
    %478 = vmatpush.bf16.msra.mxu0 0
    %479 = vmatpush.bf16.msra.mxu0 0
    %480 = vmatpush.bf16.msra.mxu0 0
    %481 = vmatpush.bf16.msra.mxu0 0
    %482 = vmatpush.bf16.msra.mxu0 0
    %483 = vmatpush.bf16.msra.mxu0 %v445
    %484 = vmatmul.bf16.gmra.mxu0 %v460
    %v485 = vpop.f32.mrf.mxu0
    %v486 = vadd.f32 %v451, %v485
    %v487 = vpop.f32.mrf.mxu0
    %v488 = vadd.f32 %v456, %v487
    %489 = vdwg.mxu0
    %490 = vst [vmem:[#allocation8] sm:$0xff] %v472
    %491 = vst [vmem:[#allocation8 + $0x8] sm:$0xff] %v486
    %492 = vst [vmem:[#allocation8 + $0x10] sm:$0xff] %v474
    %493 = vst [vmem:[#allocation8 + $0x18] sm:$0xff] %v488
    // Predicated region
    $region34: #{tpu_custom_call.1} parent=1 // pred_check
      _
    $region35: #{tpu_custom_call.1} parent=1 // pred_check_branch
      %495 = sbr.rel (0) target = $region37
    $region36: #{tpu_custom_call.1} parent=1 // pred_region
      %497 = vsyncadd [#allocation4], 0
      %s498 = sshll.u32 [#allocation8], 4
      %s499 = int_to_ptr.vmem [resolvable:$true] %s498
      %s500 = sshll.u32 %s5, 4
      %s501 = int_to_ptr.hbm [resolvable:$true] %s500
      %506 = dma.vmem_to_hbm [thread:$0]  %s499, 512, %s501, [#allocation4], 256, 256, 16
    $region37: #{tpu_custom_call.1} parent=1 // pred_fallthru
      _
    // Predicated region
    $region38: #{tpu_custom_call.1} parent=1 // pred_check
      _
    $region39: #{tpu_custom_call.1} parent=1 // pred_check_branch
      %508 = sbr.rel (0) target = $region41
    $region40: #{tpu_custom_call.1} parent=1 // pred_region
      %510 = dma.done [#allocation4], 512
    $region41: #{tpu_custom_call.1} parent=1 // pred_fallthru
      _
    %511 = vsyncpa [#allocation3], 1
    %512 = vsyncpa [#allocation6], 1
    %513 = vsyncpa [#allocation4], 1

</llo_original>
